<compile_context>
chip_gen: v7x
topology: tpu7x:2x2x1
jax: 0.10.0
libtpu: 0.0.40
codegen_flags: <defaults>
</compile_context>

<pallas_src>
import functools

import jax
import jax.numpy as jnp
from jax.experimental import pallas as pl
from jax.experimental.pallas import tpu as pltpu

_HID = 32      # MLP hidden width
_LANE = 128    # TPU lane width; hidden dims zero-padded to this
_SUB = 8       # f32 sublane granularity (batch / output-lane padding)
_PACK = 16     # bf16 sublane packing; slab segment offsets aligned to this


def _round_up(n, m):
    return ((n + m - 1) // m) * m


def _slab_offsets(d_in):
    """16-aligned row offsets of each parameter segment inside the packed slab."""
    r_b1 = _round_up(d_in, _PACK)     # bias of layer 1 (1 row, 16 reserved)
    r_w2 = r_b1 + _PACK               # w2, zero-padded to [128, 128]
    r_b2 = r_w2 + _LANE
    r_wm = r_b2 + _PACK               # mean_l weight, zero-padded to [128, 128]
    r_bm = r_wm + _LANE
    total = r_bm + _PACK
    return dict(r_b1=r_b1, r_w2=r_w2, r_b2=r_b2, r_wm=r_wm, r_bm=r_bm), total


def pack_params(params, d_in):
    """Pack w1/b1/w2/b2/wm/bm into one zero-padded bf16 [K, 128] slab."""
    offs, total = _slab_offsets(d_in)
    a = params["wm"].shape[1]

    slab = jnp.zeros((total, _LANE), jnp.float32)
    slab = slab.at[0:d_in, 0:_HID].set(params["w1"].astype(jnp.float32))
    slab = slab.at[offs["r_b1"], 0:_HID].set(params["b1"].astype(jnp.float32)[0])
    slab = slab.at[offs["r_w2"]:offs["r_w2"] + _HID, 0:_HID].set(
        params["w2"].astype(jnp.float32))
    slab = slab.at[offs["r_b2"], 0:_HID].set(params["b2"].astype(jnp.float32)[0])
    slab = slab.at[offs["r_wm"]:offs["r_wm"] + _HID, 0:a].set(
        params["wm"].astype(jnp.float32))
    slab = slab.at[offs["r_bm"], 0:a].set(params["bm"].astype(jnp.float32)[0])
    return slab.astype(jnp.bfloat16), offs


def _policy_kernel(x_ref, p_ref, out_ref, *, d_in, r_b1, r_w2, r_b2, r_wm, r_bm):
    out_w = out_ref.shape[-1]          # round_up(n_actions, 8) lanes
    x = x_ref[...]                     # [tile_b, d_in] bf16

    # lp[0]: Linear(d_in, 32) + ReLU.  bf16 matmul, f32 accumulate; padded
    # lanes (32..127) stay exactly 0 through bias-add and ReLU.
    h1 = jnp.dot(x, p_ref[0:d_in, :], preferred_element_type=jnp.float32)
    h1 = jnp.maximum(h1 + p_ref[r_b1:r_b1 + 1, :], 0.0)

    # lp[2]: Linear(32, 32) + ReLU (zero-padded [128, 128] weight segment).
    h2 = jnp.dot(h1.astype(jnp.bfloat16), p_ref[r_w2:r_w2 + _LANE, :],
                 preferred_element_type=jnp.float32)
    h2 = jnp.maximum(h2 + p_ref[r_b2:r_b2 + 1, :], 0.0)

    # mean_l: Linear(32, n_actions) -> tanh.  Only the first out_w lanes are
    # kept; the compact store is 16x less writeback than the old 128 lanes.
    m = jnp.dot(h2.astype(jnp.bfloat16), p_ref[r_wm:r_wm + _LANE, :],
                preferred_element_type=jnp.float32)
    m = m[:, :out_w] + p_ref[r_bm:r_bm + 1, :out_w]
    out_ref[...] = jnp.tanh(m)


def a2c_policy_forward(x, slab, offsets, n_actions, *, tile_b=1024):
    """A2C_policy.forward(x) -> tanh(mean_l(lp(x))), shape [B, n_actions]."""
    # Reference does x.float(); bf16 inputs (with f32 accumulation) trade a
    # tiny precision loss for half the x read traffic on a mem-bound kernel.
    x = x.astype(jnp.bfloat16)
    B, d_in = x.shape
    a_pad = _round_up(max(n_actions, 1), _SUB)      # compact 8-lane output

    # Batch tile: multiple of 8, large enough to amortize per-step overhead.
    tile_b = _round_up(min(tile_b, max(B, 1)), _SUB)
    # v7x has 2 TensorCores; "parallel" only shards the grid with >= 2 steps.
    if B >= 2 * _SUB and _round_up(B, tile_b) // tile_b < 2:
        tile_b = _round_up((B + 1) // 2, _SUB)
    b_pad = _round_up(B, tile_b)
    if b_pad != B:
        x = jnp.pad(x, ((0, b_pad - B), (0, 0)))    # garbage rows sliced later

    kernel = functools.partial(_policy_kernel, d_in=d_in, **offsets)

    out = pl.pallas_call(
        kernel,
        out_shape=jax.ShapeDtypeStruct((b_pad, a_pad), jnp.float32),
        grid=(b_pad // tile_b,),
        in_specs=[
            # x: tiled along the batch, pipelined/double-buffered.
            pl.BlockSpec((tile_b, d_in), lambda i: (i, 0)),
            # packed params: constant block index -> loaded once, VMEM-resident.
            pl.BlockSpec(slab.shape, lambda i: (0, 0)),
        ],
        # Compact [tile_b, 8] output block (vs 128-lane padded before).
        out_specs=pl.BlockSpec((tile_b, a_pad), lambda i: (i, 0)),
        compiler_params=pltpu.CompilerParams(
            dimension_semantics=("parallel",)),     # megacore sharding on v7x
    )(x, slab)

    # Drop batch padding and the zero-padded action lanes.
    return out[:B, :n_actions]


def init_params(key, in_dim, n_actions):
    """PyTorch nn.Linear default init (uniform(-1/sqrt(fan_in), +)), with
    mean_l.weight *= 0.1. Weights stored as [in, out] (transposed vs torch)."""
    ks = jax.random.split(key, 6)

    def linear(kw, kb, fan_in, fan_out):
        bound = 1.0 / jnp.sqrt(jnp.float32(fan_in))
        w = jax.random.uniform(kw, (fan_in, fan_out), jnp.float32, -bound, bound)
        b = jax.random.uniform(kb, (1, fan_out), jnp.float32, -bound, bound)
        return w, b

    w1, b1 = linear(ks[0], ks[1], in_dim, _HID)
    w2, b2 = linear(ks[2], ks[3], _HID, _HID)
    wm, bm = linear(ks[4], ks[5], _HID, n_actions)
    wm = wm * 0.1                      # mean_l.weight.data.mul_(0.1)
    # TODO(synk): var_l and logstd exist in the module but are unused in forward().
    return {"w1": w1, "b1": b1, "w2": w2, "b2": b2, "wm": wm, "bm": bm}


def reference_forward(x, p):
    x = x.astype(jnp.float32)
    h1 = jnp.maximum(x @ p["w1"] + p["b1"], 0.0)
    h2 = jnp.maximum(h1 @ p["w2"] + p["b2"], 0.0)
    return jnp.tanh(h2 @ p["wm"] + p["bm"])


if __name__ == "__main__":
    key = jax.random.PRNGKey(0)
    k_x, k_p, k_x2 = jax.random.split(key, 3)

    # BipedalWalker-like small shapes: state dim 24, action dim 4.
    D_IN, N_ACT = 24, 4
    params = init_params(k_p, D_IN, N_ACT)
    slab, offs = pack_params(params, D_IN)

    # Case 1: batch splits into a 2-step "parallel" grid (exercises megacore).
    B1 = 64
    x1 = jax.random.normal(k_x, (B1, D_IN), jnp.float32)
    out1 = jax.block_until_ready(a2c_policy_forward(x1, slab, offs, N_ACT))
    ref1 = reference_forward(x1, params)
    assert out1.shape == (B1, N_ACT)
    # bf16 inputs / f32 accumulation -> loosened tolerance vs f32 reference.
    assert jnp.allclose(out1, ref1, atol=3e-2, rtol=3e-2), float(
        jnp.max(jnp.abs(out1 - ref1)))

    # Case 2: ragged batch -> exercises padding + trailing-slice path.
    B2 = 50
    x2 = jax.random.normal(k_x2, (B2, D_IN), jnp.float32)
    out2 = jax.block_until_ready(a2c_policy_forward(x2, slab, offs, N_ACT))
    ref2 = reference_forward(x2, params)
    assert out2.shape == (B2, N_ACT)
    assert jnp.allclose(out2, ref2, atol=3e-2, rtol=3e-2), float(
        jnp.max(jnp.abs(out2 - ref2)))

    print("KERNEL_OK")
</pallas_src>

<mosaic_0001>
module attributes {stable_mosaic.version = 11 : i64} {
  func.func @_policy_kernel(%arg0: i32, %arg1: memref<32x24xbf16, #tpu.memory_space<vmem>>, %arg2: memref<336x128xbf16, #tpu.memory_space<vmem>>, %arg3: memref<32x8xf32, #tpu.memory_space<vmem>>) attributes {dimension_semantics = [#tpu.dimension_semantics<parallel>], iteration_bounds = array<i64: 2>, scalar_prefetch = 0 : i64, scratch_operands = 0 : i64, tpu.core_type = #tpu.core_type<tc>, window_params = [{transform_indices = @transform_0, window_bounds = array<i64: 32, 24>}, {pipeline_mode = #tpu.pipeline_mode<synchronous>, transform_indices = @transform_1, window_bounds = array<i64: 336, 128>}, {transform_indices = @transform_2, window_bounds = array<i64: 32, 8>}]} {
    %c0 = arith.constant 0 : index
    %c0_0 = arith.constant 0 : index
    %0 = vector.load %arg1[%c0, %c0_0] : memref<32x24xbf16, #tpu.memory_space<vmem>>, vector<32x24xbf16>
    %c0_1 = arith.constant 0 : index
    %c0_2 = arith.constant 0 : index
    %1 = vector.load %arg2[%c0_1, %c0_2] : memref<336x128xbf16, #tpu.memory_space<vmem>>, vector<24x128xbf16>
    %cst = arith.constant dense<0.000000e+00> : vector<32x128xf32>
    %2 = tpu.matmul %0, %1, %cst {dimension_numbers = #tpu.dot_dimension_numbers<[1], [0], [0], [1], [0, 0, 1, 1], [], []>} : vector<32x24xbf16>, vector<24x128xbf16>, vector<32x128xf32> -> vector<32x128xf32>
    %c32 = arith.constant 32 : index
    %c0_3 = arith.constant 0 : index
    %3 = vector.load %arg2[%c32, %c0_3] : memref<336x128xbf16, #tpu.memory_space<vmem>>, vector<1x128xbf16>
    %4 = arith.extf %3 : vector<1x128xbf16> to vector<1x128xf32>
    %5 = vector.broadcast %4 : vector<1x128xf32> to vector<32x128xf32>
    %6 = arith.addf %2, %5 : vector<32x128xf32>
    %cst_4 = arith.constant 0.000000e+00 : f32
    %7 = vector.broadcast %cst_4 : f32 to vector<32x128xf32>
    %8 = arith.maximumf %6, %7 : vector<32x128xf32>
    %9 = arith.truncf %8 : vector<32x128xf32> to vector<32x128xbf16>
    %c48 = arith.constant 48 : index
    %c0_5 = arith.constant 0 : index
    %10 = vector.load %arg2[%c48, %c0_5] : memref<336x128xbf16, #tpu.memory_space<vmem>>, vector<128x128xbf16>
    %cst_6 = arith.constant dense<0.000000e+00> : vector<32x128xf32>
    %11 = tpu.matmul %9, %10, %cst_6 {dimension_numbers = #tpu.dot_dimension_numbers<[1], [0], [0], [1], [0, 0, 1, 1], [], []>} : vector<32x128xbf16>, vector<128x128xbf16>, vector<32x128xf32> -> vector<32x128xf32>
    %c176 = arith.constant 176 : index
    %c0_7 = arith.constant 0 : index
    %12 = vector.load %arg2[%c176, %c0_7] : memref<336x128xbf16, #tpu.memory_space<vmem>>, vector<1x128xbf16>
    %13 = arith.extf %12 : vector<1x128xbf16> to vector<1x128xf32>
    %14 = vector.broadcast %13 : vector<1x128xf32> to vector<32x128xf32>
    %15 = arith.addf %11, %14 : vector<32x128xf32>
    %cst_8 = arith.constant 0.000000e+00 : f32
    %16 = vector.broadcast %cst_8 : f32 to vector<32x128xf32>
    %17 = arith.maximumf %15, %16 : vector<32x128xf32>
    %18 = arith.truncf %17 : vector<32x128xf32> to vector<32x128xbf16>
    %c192 = arith.constant 192 : index
    %c0_9 = arith.constant 0 : index
    %19 = vector.load %arg2[%c192, %c0_9] : memref<336x128xbf16, #tpu.memory_space<vmem>>, vector<128x128xbf16>
    %cst_10 = arith.constant dense<0.000000e+00> : vector<32x128xf32>
    %20 = tpu.matmul %18, %19, %cst_10 {dimension_numbers = #tpu.dot_dimension_numbers<[1], [0], [0], [1], [0, 0, 1, 1], [], []>} : vector<32x128xbf16>, vector<128x128xbf16>, vector<32x128xf32> -> vector<32x128xf32>
    %21 = vector.extract_strided_slice %20 {offsets = [0, 0], sizes = [32, 8], strides = [1, 1]} : vector<32x128xf32> to vector<32x8xf32>
    %c320 = arith.constant 320 : index
    %c0_11 = arith.constant 0 : index
    %22 = vector.load %arg2[%c320, %c0_11] : memref<336x128xbf16, #tpu.memory_space<vmem>>, vector<1x8xbf16>
    %23 = arith.extf %22 : vector<1x8xbf16> to vector<1x8xf32>
    %24 = vector.broadcast %23 : vector<1x8xf32> to vector<32x8xf32>
    %25 = arith.addf %21, %24 : vector<32x8xf32>
    %26 = math.tanh %25 : vector<32x8xf32>
    %c0_12 = arith.constant 0 : index
    %c0_13 = arith.constant 0 : index
    %27 = vector.load %arg3[%c0_12, %c0_13] : memref<32x8xf32, #tpu.memory_space<vmem>>, vector<32x8xf32>
    tpu.vector_store %arg3[%c0_12, %c0_13], %26 {strides = array<i32>} : memref<32x8xf32, #tpu.memory_space<vmem>>, vector<32x8xf32>,
    return
  }
  func.func @transform_0(%arg0: i32) -> (i32, i32) {
    %c0_i32 = arith.constant 0 : i32
    %c0_i32_0 = arith.constant 0 : i32
    return %arg0, %c0_i32 : i32, i32
  }
  func.func @transform_1(%arg0: i32) -> (i32, i32) {
    %c0_i32 = arith.constant 0 : i32
    %c0_i32_0 = arith.constant 0 : i32
    %c0_i32_1 = arith.constant 0 : i32
    return %c0_i32, %c0_i32_0 : i32, i32
  }
  func.func @transform_2(%arg0: i32) -> (i32, i32) {
    %c0_i32 = arith.constant 0 : i32
    %c0_i32_0 = arith.constant 0 : i32
    return %arg0, %c0_i32 : i32, i32
  }
}

</mosaic_0001>

<llo_original>
// kernel: tpu_custom_call.1
$region0: #{tpu_custom_call.1}
  #allocation0 [shape = 'u32[]', space=smem, size = 0x4, offset = 0x4, fixed_abs, tag = 'smem constant byte address 0x4 - core index']
  #allocation1 [shape = 'u32[144,128]{1,0:T(1,128)}', space=vmem, size = 0x12000, scoped, tag = 'internal scratch']
  %s0 = inlined_call_operand.vmem [shape: bf16[64,24], index: 0, kind: input, shape index: {}]
  %s1 = inlined_call_operand.hbm [shape: bf16[336,128], index: 1, kind: input, shape index: {}]
  %s2 = inlined_call_operand.vmem [shape: f32[64,8], index: 2, kind: output, shape index: {}]
  %s3 = sld [smem:[#allocation0]]
  $region45: #{tpu_custom_call.1} parent=0
    _
  %s5 = ssub.s32 1, %s3
  %s6 = scalar_select 0, %s5, %s3
  $region1: #{tpu_custom_call.1} parent=0
    #allocation2 [shape = 'u8[86016]{0}', space=vmem, size = 0x15000, scoped, tag = 'input window, operand 1, single buffered']
    #allocation3 [shape = 's32[2]{0}', space=sflag, size = 0x8, scoped, tag = 'scoped memory for tpu_custom_call.1']
    %7 = vsyncpa [#allocation3], 0
    loop: start=0, step=1, limit=4
    $region2: #{tpu_custom_call.1} parent=1 // loop_pre_header
      _
    $region3: #{tpu_custom_call.1} parent=1 // loop_header
      %s9 = sphi 0, %s13
      %p10 = scmp.ge.s32.totalorder %s9, 4
      %s19 = sphi 0, %s21
      %s22 = sphi 0, %s19
      %s23 = sphi 0, %s22
      %s39 = sphi 0, %s23
      %s43 = sphi 0, %s43
      %s45 = sphi 0, %s43
      %s46 = sphi 0, %s45
      %s60 = sphi 0, %s46
      %s66 = sphi 0, %s68
      %s69 = sphi 0, %s66
      %s70 = sphi 0, %s69
      %s86 = sphi 0, %s70
    $region4: #{tpu_custom_call.1} parent=1 // loop_header_branch
      %12 = sbr.rel (%p10) target = $region8
    $region5: #{tpu_custom_call.1} parent=1 // loop_body
      %s14 = ssub.s32 %s9, 1
      %s15 = ssub.s32 %s9, 2
      %s16 = sadd.s32 %s9, 1
      %s17 = ssub.s32 %s9, %s16
      %p18 = scmp.eq.s32.totalorder %s17, 0
      %s20 = sadd.s32 %s19, 1
      %s21 = scalar_select %p18, %s19, %s20
      %p24 = pneg %p18
      %p25 = scmp.eq.s32.totalorder %s9, 1
      %p26 = por %p24, %p25
      %p27 = scmp.ne.s32.totalorder %s19, %s22
      %p28 = scmp.eq.s32.totalorder %s9, 0
      %p29 = por %p27, %p28
      %p30 = scmp.ne.s32.totalorder %s19, %s22
      %p31 = scmp.eq.s32.totalorder %s14, 1
      %p32 = por %p30, %p31
      %p33 = scmp.ne.s32.totalorder %s22, %s23
      %p34 = scmp.eq.s32.totalorder %s14, 0
      %p35 = por %p33, %p34
      %p36 = scmp.ne.s32.totalorder %s22, %s23
      %p37 = scmp.eq.s32.totalorder %s15, 1
      %p38 = por %p36, %p37
      %p40 = scmp.ne.s32.totalorder %s23, %s39
      %p41 = scmp.eq.s32.totalorder %s15, 0
      %p42 = por %p40, %p41
      %s44 = sadd.s32 %s43, 1
      %p47 = scmp.eq.s32.totalorder %s9, 1
      %p48 = scmp.ne.s32.totalorder %s43, %s45
      %p49 = scmp.eq.s32.totalorder %s9, 0
      %p50 = por %p48, %p49
      %p51 = scmp.ne.s32.totalorder %s43, %s45
      %p52 = scmp.eq.s32.totalorder %s14, 1
      %p53 = por %p51, %p52
      %p54 = scmp.ne.s32.totalorder %s45, %s46
      %p55 = scmp.eq.s32.totalorder %s14, 0
      %p56 = por %p54, %p55
      %p57 = scmp.ne.s32.totalorder %s45, %s46
      %p58 = scmp.eq.s32.totalorder %s15, 1
      %p59 = por %p57, %p58
      %p61 = scmp.ne.s32.totalorder %s46, %s60
      %p62 = scmp.eq.s32.totalorder %s15, 0
      %p63 = por %p61, %p62
      %s64 = ssub.s32 %s9, %s16
      %p65 = scmp.eq.s32.totalorder %s64, 0
      %s67 = sadd.s32 %s66, 1
      %s68 = scalar_select %p65, %s66, %s67
      %p71 = pneg %p65
      %p72 = scmp.eq.s32.totalorder %s9, 1
      %p73 = por %p71, %p72
      %p74 = scmp.ne.s32.totalorder %s66, %s69
      %p75 = scmp.eq.s32.totalorder %s9, 0
      %p76 = por %p74, %p75
      %p77 = scmp.ne.s32.totalorder %s66, %s69
      %p78 = scmp.eq.s32.totalorder %s14, 1
      %p79 = por %p77, %p78
      %p80 = scmp.ne.s32.totalorder %s69, %s70
      %p81 = scmp.eq.s32.totalorder %s14, 0
      %p82 = por %p80, %p81
      %p83 = scmp.ne.s32.totalorder %s69, %s70
      %p84 = scmp.eq.s32.totalorder %s15, 1
      %p85 = por %p83, %p84
      %p87 = scmp.ne.s32.totalorder %s70, %s86
      %p88 = scmp.eq.s32.totalorder %s15, 0
      %p89 = por %p87, %p88
      %p90 = scmp.le.s32.totalorder 1, %s9
      %p91 = scmp.lt.s32.totalorder %s9, 3
      %p92 = pnand %p90, %p91
      %p93 = pneg %p92
      // Predicated region
      $region9: #{tpu_custom_call.1} parent=5 // pred_check
        _
      $region10: #{tpu_custom_call.1} parent=5 // pred_check_branch
        %95 = sbr.rel (%p92) target = $region12
      $region11: #{tpu_custom_call.1} parent=5 // pred_region
        %s96 = ssub.s32 %s9, 1
        // Predicated region
        $region13: #{tpu_custom_call.1} parent=11 // pred_check
          %p97 = pneg %p56
        $region14: #{tpu_custom_call.1} parent=11 // pred_check_branch
          %99 = sbr.rel (%p97) target = $region16
        $region15: #{tpu_custom_call.1} parent=11 // pred_region
          %s101 = ssub.s32 2688, 2688
          %102 = vsyncadd [#allocation3], %s101
          %s103 = sshll.u32 [#allocation2], 4
          %s104 = int_to_ptr.vmem [resolvable:$true] %s103
          %109 = dma.hbm_to_vmem [thread:$0]  %s1, 2688, %s104, [#allocation3], 64, 64, 4
        $region16: #{tpu_custom_call.1} parent=11 // pred_fallthru
          _
      $region12: #{tpu_custom_call.1} parent=5 // pred_fallthru
        _
      %p110 = scmp.lt.s32.totalorder %s9, 2
      // Predicated region
      $region17: #{tpu_custom_call.1} parent=5 // pred_check
        %p111 = pneg %p110
      $region18: #{tpu_custom_call.1} parent=5 // pred_check_branch
        %113 = sbr.rel (%p111) target = $region20
      $region19: #{tpu_custom_call.1} parent=5 // pred_region
        // Predicated region
        $region21: #{tpu_custom_call.1} parent=19 // pred_check
          %p114 = pneg %p29
        $region22: #{tpu_custom_call.1} parent=19 // pred_check_branch
          %116 = sbr.rel (%p114) target = $region24
        $region23: #{tpu_custom_call.1} parent=19 // pred_region
          %s117 = smul.u32 4, %s9
          %p118 = scmp.lt.s32.totalorder %s117, 7
          %s119 = scalar_select %p118, %s117, 7
          %s120 = smul.addr %s119, 4
          %s121 = scalar_lea.vmem %s0, %s120
          %s122 = smul.u32 4, %s9
        $region24: #{tpu_custom_call.1} parent=19 // pred_fallthru
          _
      $region20: #{tpu_custom_call.1} parent=5 // pred_fallthru
        _
      %p123 = scmp.le.s32.totalorder 1, %s9
      %p124 = scmp.lt.s32.totalorder %s9, 3
      %p125 = pnand %p123, %p124
      %p126 = pneg %p125
      // Predicated region
      $region25: #{tpu_custom_call.1} parent=5 // pred_check
        _
      $region26: #{tpu_custom_call.1} parent=5 // pred_check_branch
        %128 = sbr.rel (%p125) target = $region28
      $region27: #{tpu_custom_call.1} parent=5 // pred_region
        %s129 = ssub.s32 %s9, 1
        // Predicated region
        $region29: #{tpu_custom_call.1} parent=27 // pred_check
          %p130 = pneg %p56
        $region30: #{tpu_custom_call.1} parent=27 // pred_check_branch
          %132 = sbr.rel (%p130) target = $region32
        $region31: #{tpu_custom_call.1} parent=27 // pred_region
          %133 = dma.done [#allocation3], 2688
        $region32: #{tpu_custom_call.1} parent=27 // pred_fallthru
          _
        %s134 = smul.u32 4, %s14
        %p135 = scmp.lt.s32.totalorder %s134, 7
        %s136 = scalar_select %p135, %s134, 7
        %s137 = smul.addr %s136, 4
        %s138 = scalar_lea.vmem %s0, %s137
        %p139 = pneg %p35
        %p140 = pneg %p32
        %p141 = pneg %p56
        %p142 = pneg %p53
        %p143 = pneg %p82
        %p144 = pneg %p79
        %s145 = smul.u32 4, %s14
        %p146 = scmp.lt.s32.totalorder %s145, 7
        %s147 = scalar_select %p146, %s145, 7
        %s148 = smul.addr %s147, 8
        %s149 = scalar_lea.vmem %s2, %s148
        %s150 = smul.u32 4, %s14
        %p151 = scmp.lt.s32.totalorder %s150, 7
        %s152 = scalar_select %p151, %s150, 7
        %s153 = smul.addr %s152, 4
        %s154 = scalar_lea.vmem %s0, %s153
        %s155 = smul.u32 4, %s14
        %s156 = smul.u32 4, %s14
        %p157 = scmp.lt.s32.totalorder %s156, 7
        %s158 = scalar_select %p157, %s156, 7
        %s159 = smul.addr %s158, 8
        %s160 = scalar_lea.vmem %s2, %s159
        %s161 = smul.u32 4, %s14
        %v163 = vld [vmem:[%s154] sm:$0xf]
        %v164 = vld [vmem:[%s154 + $0x4] sm:$0xf]
        %v165 = vld [vmem:[%s154 + $0x8] sm:$0xf]
        %v166 = vld [vmem:[%s154 + $0xc] sm:$0xf]
        %v167 = vld [vmem:[#allocation2] sm:$0xf]
        %v168 = vld [vmem:[#allocation2 + $0x4] sm:$0xf]
        %v169 = vld [vmem:[#allocation2 + $0x8] sm:$0xf]
        %v170 = vld [vmem:[#allocation2 + $0x10] sm:$0x1]
        %v171 = vunpack.c.l.bf16 %v170
        %v172 = vlaneseq
        %v173 = vshrl.u32 %v172, 7
        %v174 = vsub.s32 0, %v173
        %v175 = vrot.slane %v171, %v174
        %v180 = vunpack.c.l.b16 %v163
        %v181 = vunpack.c.l.b16 %v164
        %v182 = vunpack.c.l.b16 %v165
        %v183 = vunpack.c.l.b16 %v166
        %v184 = vpack.c.b16 %v181, %v180
        %v185 = vpack.c.b16 %v183, %v182
        %v189 = vunpack.c.l.b16 %v167
        %v190 = vunpack.c.l.b16 %v168
        %v191 = vunpack.c.l.b16 %v169
        %v192 = vpack.c.b16 %v190, %v189
        %v193 = vpack.c.b16 %v191, %v191
        %vm195 = vcmask 195584
        %v197 = vsel %vm195, %v184, 0
        %v200 = vsel %vm195, %v185, 0
        %vm202 = vcmask 1043456
        %v204 = vsel %vm202, %v193, 0
        %206 = vmatprep.subr.bf16.mxu0 0
        %207 = vmatpush1.bf16.msra.mxu0 %v192
        %208 = vmatprep.subr.bf16.mxu0 0
        %209 = vmatpush1.bf16.msra.mxu0 %v204
        %210 = vmatprep.subr.bf16.mxu0 0
        %211 = vmatpush1.bf16.msra.mxu0 0
        %212 = vmatprep.subr.bf16.mxu0 0
        %213 = vmatpush1.bf16.msra.mxu0 0
        %214 = vmatprep.subr.bf16.mxu0 0
        %215 = vmatpush1.bf16.msra.mxu0 0
        %216 = vmatprep.subr.bf16.mxu0 0
        %217 = vmatpush1.bf16.msra.mxu0 0
        %218 = vmatprep.subr.bf16.mxu0 0
        %219 = vmatpush1.bf16.msra.mxu0 0
        %220 = vmatprep.subr.bf16.mxu0 0
        %221 = vmatpush1.bf16.msra.mxu0 0
        %222 = vmatprep.subr.bf16.mxu0 0
        %223 = vmatpush1.bf16.msra.mxu0 0
        %224 = vmatprep.subr.bf16.mxu0 0
        %225 = vmatpush1.bf16.msra.mxu0 0
        %226 = vmatprep.subr.bf16.mxu0 0
        %227 = vmatpush1.bf16.msra.mxu0 0
        %228 = vmatprep.subr.bf16.mxu0 0
        %229 = vmatpush1.bf16.msra.mxu0 0
        %230 = vmatprep.subr.bf16.mxu0 0
        %231 = vmatpush1.bf16.msra.mxu0 0
        %232 = vmatprep.subr.bf16.mxu0 0
        %233 = vmatpush1.bf16.msra.mxu0 0
        %234 = vmatprep.subr.bf16.mxu0 0
        %235 = vmatpush1.bf16.msra.mxu0 0
        %236 = vmatprep.subr.bf16.mxu0 0
        %237 = vmatpush1.bf16.msra.mxu0 0
        %238 = vmatprep.mubr.bf16.mxu0 0
        %239 = vmatmul.mubr.bf16.gmra.mrb[0].mxu0 %v197
        %v240 = vpop.f32.mrb[0].mxu0
        %v241 = vadd.f32 %v175, %v240
        %v242 = vpop.f32.mrb[0].mxu0
        %v243 = vpop.f32.mrb[0].mxu0
        %v244 = vadd.f32 %v175, %v243
        %v245 = vpop.f32.mrb[0].mxu0
        %246 = vmatprep.mubr.bf16.mxu0 0
        %247 = vmatmul.mubr.bf16.gmra.mrb[0].mxu0 %v200
        %v248 = vpop.f32.mrb[0].mxu0
        %v249 = vadd.f32 %v175, %v248
        %v250 = vpop.f32.mrb[0].mxu0
        %v251 = vpop.f32.mrb[0].mxu0
        %v252 = vadd.f32 %v175, %v251
        %v253 = vpop.f32.mrb[0].mxu0
        %254 = vdwg.mxu0
        %v255 = vmax.f32 %v241, 0.0
        %v256 = vmax.f32 %v244, 0.0
        %v257 = vmax.f32 %v249, 0.0
        %v258 = vmax.f32 %v252, 0.0
        %v259 = vpack.c.bf16 %v256, %v255
        %v260 = vpack.c.bf16 %v258, %v257
        %v261 = vld [vmem:[#allocation2 + $0x18] sm:$0xf]
        %v262 = vld [vmem:[#allocation2 + $0x1c] sm:$0xf]
        %v263 = vld [vmem:[#allocation2 + $0x20] sm:$0xf]
        %v264 = vld [vmem:[#allocation2 + $0x24] sm:$0xf]
        %v265 = vld [vmem:[#allocation2 + $0x28] sm:$0xf]
        %v266 = vld [vmem:[#allocation2 + $0x2c] sm:$0xf]
        %v267 = vld [vmem:[#allocation2 + $0x30] sm:$0xf]
        %v268 = vld [vmem:[#allocation2 + $0x34] sm:$0xf]
        %v269 = vld [vmem:[#allocation2 + $0x38] sm:$0xf]
        %v270 = vld [vmem:[#allocation2 + $0x3c] sm:$0xf]
        %v271 = vld [vmem:[#allocation2 + $0x40] sm:$0xf]
        %v272 = vld [vmem:[#allocation2 + $0x44] sm:$0xf]
        %v273 = vld [vmem:[#allocation2 + $0x48] sm:$0xf]
        %v274 = vld [vmem:[#allocation2 + $0x4c] sm:$0xf]
        %v275 = vld [vmem:[#allocation2 + $0x50] sm:$0xf]
        %v276 = vld [vmem:[#allocation2 + $0x54] sm:$0xf]
        %v277 = vld [vmem:[#allocation2 + $0x58] sm:$0x1]
        %v278 = vunpack.c.l.bf16 %v277
        %v279 = vlaneseq
        %v280 = vshrl.u32 %v279, 7
        %v281 = vsub.s32 0, %v280
        %v282 = vrot.slane %v278, %v281
        %v299 = vunpack.c.l.b16 %v261
        %v300 = vunpack.c.l.b16 %v262
        %v301 = vunpack.c.l.b16 %v263
        %v302 = vunpack.c.l.b16 %v264
        %v303 = vunpack.c.l.b16 %v265
        %v304 = vunpack.c.l.b16 %v266
        %v305 = vunpack.c.l.b16 %v267
        %v306 = vunpack.c.l.b16 %v268
        %v307 = vunpack.c.l.b16 %v269
        %v308 = vunpack.c.l.b16 %v270
        %v309 = vunpack.c.l.b16 %v271
        %v310 = vunpack.c.l.b16 %v272
        %v311 = vunpack.c.l.b16 %v273
        %v312 = vunpack.c.l.b16 %v274
        %v313 = vunpack.c.l.b16 %v275
        %v314 = vunpack.c.l.b16 %v276
        %v315 = vpack.c.b16 %v300, %v299
        %v316 = vpack.c.b16 %v302, %v301
        %v317 = vpack.c.b16 %v304, %v303
        %v318 = vpack.c.b16 %v306, %v305
        %v319 = vpack.c.b16 %v308, %v307
        %v320 = vpack.c.b16 %v310, %v309
        %v321 = vpack.c.b16 %v312, %v311
        %v322 = vpack.c.b16 %v314, %v313
        %331 = vmatprep.subr.bf16.mxu0 0
        %332 = vmatpush1.bf16.msra.mxu0 %v315
        %333 = vmatprep.subr.bf16.mxu0 0
        %334 = vmatpush1.bf16.msra.mxu0 %v316
        %335 = vmatprep.subr.bf16.mxu0 0
        %336 = vmatpush1.bf16.msra.mxu0 %v317
        %337 = vmatprep.subr.bf16.mxu0 0
        %338 = vmatpush1.bf16.msra.mxu0 %v318
        %339 = vmatprep.subr.bf16.mxu0 0
        %340 = vmatpush1.bf16.msra.mxu0 %v319
        %341 = vmatprep.subr.bf16.mxu0 0
        %342 = vmatpush1.bf16.msra.mxu0 %v320
        %343 = vmatprep.subr.bf16.mxu0 0
        %344 = vmatpush1.bf16.msra.mxu0 %v321
        %345 = vmatprep.subr.bf16.mxu0 0
        %346 = vmatpush1.bf16.msra.mxu0 %v322
        %347 = vmatprep.subr.bf16.mxu0 0
        %348 = vmatpush1.bf16.msra.mxu0 0
        %349 = vmatprep.subr.bf16.mxu0 0
        %350 = vmatpush1.bf16.msra.mxu0 0
        %351 = vmatprep.subr.bf16.mxu0 0
        %352 = vmatpush1.bf16.msra.mxu0 0
        %353 = vmatprep.subr.bf16.mxu0 0
        %354 = vmatpush1.bf16.msra.mxu0 0
        %355 = vmatprep.subr.bf16.mxu0 0
        %356 = vmatpush1.bf16.msra.mxu0 0
        %357 = vmatprep.subr.bf16.mxu0 0
        %358 = vmatpush1.bf16.msra.mxu0 0
        %359 = vmatprep.subr.bf16.mxu0 0
        %360 = vmatpush1.bf16.msra.mxu0 0
        %361 = vmatprep.subr.bf16.mxu0 0
        %362 = vmatpush1.bf16.msra.mxu0 0
        %363 = vmatprep.mubr.bf16.mxu0 0
        %364 = vmatmul.mubr.bf16.gmra.mrb[0].mxu0 %v259
        %v365 = vpop.f32.mrb[0].mxu0
        %v366 = vadd.f32 %v282, %v365
        %v367 = vpop.f32.mrb[0].mxu0
        %v368 = vpop.f32.mrb[0].mxu0
        %v369 = vadd.f32 %v282, %v368
        %v370 = vpop.f32.mrb[0].mxu0
        %371 = vmatprep.mubr.bf16.mxu0 0
        %372 = vmatmul.mubr.bf16.gmra.mrb[0].mxu0 %v260
        %v373 = vpop.f32.mrb[0].mxu0
        %v374 = vadd.f32 %v282, %v373
        %v375 = vpop.f32.mrb[0].mxu0
        %v376 = vpop.f32.mrb[0].mxu0
        %v377 = vadd.f32 %v282, %v376
        %v378 = vpop.f32.mrb[0].mxu0
        %379 = vdwg.mxu0
        %v380 = vmax.f32 %v366, 0.0
        %v381 = vmax.f32 %v369, 0.0
        %v382 = vmax.f32 %v374, 0.0
        %v383 = vmax.f32 %v377, 0.0
        %v384 = vpack.c.bf16 %v381, %v380
        %v385 = vpack.c.bf16 %v383, %v382
        %v386 = vld [vmem:[#allocation2 + $0x60] sm:$0xf]
        %v387 = vld [vmem:[#allocation2 + $0x64] sm:$0xf]
        %v388 = vld [vmem:[#allocation2 + $0x68] sm:$0xf]
        %v389 = vld [vmem:[#allocation2 + $0x6c] sm:$0xf]
        %v390 = vld [vmem:[#allocation2 + $0x70] sm:$0xf]
        %v391 = vld [vmem:[#allocation2 + $0x74] sm:$0xf]
        %v392 = vld [vmem:[#allocation2 + $0x78] sm:$0xf]
        %v393 = vld [vmem:[#allocation2 + $0x7c] sm:$0xf]
        %v394 = vld [vmem:[#allocation2 + $0x80] sm:$0xf]
        %v395 = vld [vmem:[#allocation2 + $0x84] sm:$0xf]
        %v396 = vld [vmem:[#allocation2 + $0x88] sm:$0xf]
        %v397 = vld [vmem:[#allocation2 + $0x8c] sm:$0xf]
        %v398 = vld [vmem:[#allocation2 + $0x90] sm:$0xf]
        %v399 = vld [vmem:[#allocation2 + $0x94] sm:$0xf]
        %v400 = vld [vmem:[#allocation2 + $0x98] sm:$0xf]
        %v401 = vld [vmem:[#allocation2 + $0x9c] sm:$0xf]
        %v418 = vunpack.c.l.b16 %v386
        %v419 = vunpack.c.l.b16 %v387
        %v420 = vunpack.c.l.b16 %v388
        %v421 = vunpack.c.l.b16 %v389
        %v422 = vunpack.c.l.b16 %v390
        %v423 = vunpack.c.l.b16 %v391
        %v424 = vunpack.c.l.b16 %v392
        %v425 = vunpack.c.l.b16 %v393
        %v426 = vunpack.c.l.b16 %v394
        %v427 = vunpack.c.l.b16 %v395
        %v428 = vunpack.c.l.b16 %v396
        %v429 = vunpack.c.l.b16 %v397
        %v430 = vunpack.c.l.b16 %v398
        %v431 = vunpack.c.l.b16 %v399
        %v432 = vunpack.c.l.b16 %v400
        %v433 = vunpack.c.l.b16 %v401
        %v434 = vpack.c.b16 %v419, %v418
        %v435 = vpack.c.b16 %v421, %v420
        %v436 = vpack.c.b16 %v423, %v422
        %v437 = vpack.c.b16 %v425, %v424
        %v438 = vpack.c.b16 %v427, %v426
        %v439 = vpack.c.b16 %v429, %v428
        %v440 = vpack.c.b16 %v431, %v430
        %v441 = vpack.c.b16 %v433, %v432
        %450 = vmatprep.subr.bf16.mxu0 0
        %451 = vmatpush1.bf16.msra.mxu0 %v434
        %452 = vmatprep.subr.bf16.mxu0 0
        %453 = vmatpush1.bf16.msra.mxu0 %v435
        %454 = vmatprep.subr.bf16.mxu0 0
        %455 = vmatpush1.bf16.msra.mxu0 %v436
        %456 = vmatprep.subr.bf16.mxu0 0
        %457 = vmatpush1.bf16.msra.mxu0 %v437
        %458 = vmatprep.subr.bf16.mxu0 0
        %459 = vmatpush1.bf16.msra.mxu0 %v438
        %460 = vmatprep.subr.bf16.mxu0 0
        %461 = vmatpush1.bf16.msra.mxu0 %v439
        %462 = vmatprep.subr.bf16.mxu0 0
        %463 = vmatpush1.bf16.msra.mxu0 %v440
        %464 = vmatprep.subr.bf16.mxu0 0
        %465 = vmatpush1.bf16.msra.mxu0 %v441
        %466 = vmatprep.subr.bf16.mxu0 0
        %467 = vmatpush1.bf16.msra.mxu0 0
        %468 = vmatprep.subr.bf16.mxu0 0
        %469 = vmatpush1.bf16.msra.mxu0 0
        %470 = vmatprep.subr.bf16.mxu0 0
        %471 = vmatpush1.bf16.msra.mxu0 0
        %472 = vmatprep.subr.bf16.mxu0 0
        %473 = vmatpush1.bf16.msra.mxu0 0
        %474 = vmatprep.subr.bf16.mxu0 0
        %475 = vmatpush1.bf16.msra.mxu0 0
        %476 = vmatprep.subr.bf16.mxu0 0
        %477 = vmatpush1.bf16.msra.mxu0 0
        %478 = vmatprep.subr.bf16.mxu0 0
        %479 = vmatpush1.bf16.msra.mxu0 0
        %480 = vmatprep.subr.bf16.mxu0 0
        %481 = vmatpush1.bf16.msra.mxu0 0
        %482 = vmatprep.mubr.bf16.mxu0 0
        %483 = vmatmul.mubr.bf16.gmra.mrb[0].mxu0 %v384
        %v484 = vpop.f32.mrb[0].mxu0
        %v485 = vadd.f32 0.0, %v484
        %v486 = vpop.f32.mrb[0].mxu0
        %v487 = vpop.f32.mrb[0].mxu0
        %v488 = vadd.f32 0.0, %v487
        %v489 = vpop.f32.mrb[0].mxu0
        %490 = vmatprep.mubr.bf16.mxu0 0
        %491 = vmatmul.mubr.bf16.gmra.mrb[0].mxu0 %v385
        %v492 = vpop.f32.mrb[0].mxu0
        %v493 = vadd.f32 0.0, %v492
        %v494 = vpop.f32.mrb[0].mxu0
        %v495 = vpop.f32.mrb[0].mxu0
        %v496 = vadd.f32 0.0, %v495
        %v497 = vpop.f32.mrb[0].mxu0
        %498 = vdwg.mxu0
        %v499 = vld [vmem:[#allocation2 + $0xa0] sm:$0x1]
        %v500 = vunpack.c.l.bf16 %v499
        %v501 = vlaneseq
        %v502 = vshrl.u32 %v501, 7
        %v503 = vsub.s32 0, %v502
        %v504 = vrot.slane %v500, %v503
        %v505 = vadd.f32 %v485, %v504
        %v506 = vadd.f32 %v488, %v504
        %v507 = vadd.f32 %v493, %v504
        %v508 = vadd.f32 %v496, %v504
        %v509 = vtanh.pop %v505
        %v510 = vtanh.pop %v506
        %v511 = vtanh.pop %v507
        %v512 = vtanh.pop %v508
        %vm513 = vcmask 64512
        %514 = vst.msk [vmem:[%s160] sm:$0xff] %vm513, %v509
        %515 = vst.msk [vmem:[%s160 + $0x8] sm:$0xff] %vm513, %v510
        %516 = vst.msk [vmem:[%s160 + $0x10] sm:$0xff] %vm513, %v511
        %517 = vst.msk [vmem:[%s160 + $0x18] sm:$0xff] %vm513, %v512
        %s518 = smul.u32 4, %s14
        %p519 = scmp.lt.s32.totalorder %s518, 7
        %s520 = scalar_select %p519, %s518, 7
        %s521 = smul.addr %s520, 8
        %s522 = scalar_lea.vmem %s2, %s521
        // Predicated region
        $region33: #{tpu_custom_call.1} parent=27 // pred_check
          %p523 = pneg %p79
        $region34: #{tpu_custom_call.1} parent=27 // pred_check_branch
          %525 = sbr.rel (%p523) target = $region36
        $region35: #{tpu_custom_call.1} parent=27 // pred_region
          %s526 = smul.u32 4, %s14
        $region36: #{tpu_custom_call.1} parent=27 // pred_fallthru
          _
      $region28: #{tpu_custom_call.1} parent=5 // pred_fallthru
        _
      %p527 = scmp.le.s32.totalorder 2, %s9
      // Predicated region
      $region37: #{tpu_custom_call.1} parent=5 // pred_check
        %p528 = pneg %p527
      $region38: #{tpu_custom_call.1} parent=5 // pred_check_branch
        %530 = sbr.rel (%p528) target = $region40
      $region39: #{tpu_custom_call.1} parent=5 // pred_region
        %s531 = ssub.s32 %s9, 2
        // Predicated region
        $region41: #{tpu_custom_call.1} parent=39 // pred_check
          %p532 = pneg %p85
        $region42: #{tpu_custom_call.1} parent=39 // pred_check_branch
          %534 = sbr.rel (%p532) target = $region44
        $region43: #{tpu_custom_call.1} parent=39 // pred_region
          %s535 = smul.u32 4, %s15
          %p536 = scmp.lt.s32.totalorder %s535, 7
          %s537 = scalar_select %p536, %s535, 7
          %s538 = smul.addr %s537, 8
          %s539 = scalar_lea.vmem %s2, %s538
        $region44: #{tpu_custom_call.1} parent=39 // pred_fallthru
          _
      $region40: #{tpu_custom_call.1} parent=5 // pred_fallthru
        _
    $region6: #{tpu_custom_call.1} parent=1 // loop_footer
      %s13 = sadd.s32 1, %s9
    $region7: #{tpu_custom_call.1} parent=1 // loop_footer_branch
      %8 = sbr.rel target = $region3
    $region8: #{tpu_custom_call.1} parent=1 // loop_exit
      _
    %540 = vsyncpa [#allocation3], 1
    %s541 = scalar_lea.sflag [#allocation3], 1
    %542 = vsyncpa %s541, 1

</llo_original>
